<compile_context>
chip_gen: v5e
topology: v5e:2x2
jax: 0.10.0
libtpu: 0.0.40
codegen_flags: <defaults>
</compile_context>

<pallas_src>
import jax
import jax.numpy as jnp
from jax.experimental import pallas as pl
from jax.experimental.pallas import tpu as pltpu


def _torgb_kernel(w_ref, b_ref, x_ref, o_ref):
    """Per-pixel channel projection: y[o, p] = sum_c w[o, c] * x[c, p] + b[o].

    w_ref: SMEM (C_out, C_in) f32 scalars
    b_ref: SMEM (C_out,)      f32 scalars
    x_ref: VMEM (1, C_in,  TILE_P)
    o_ref: VMEM (1, C_out, TILE_P)
    """
    c_out, c_in = w_ref.shape
    # Hoist the input-row loads (each is a (1, TILE_P) lane-dense slab) so the
    # unrolled C_out loop reuses them instead of re-reading VMEM per output.
    xs = [x_ref[0, c:c + 1, :].astype(jnp.float32) for c in range(c_in)]
    for o in range(c_out):                          # static unroll (C_out == 3)
        acc = xs[0] * w_ref[o, 0] + b_ref[o]
        for c in range(1, c_in):                    # static unroll (C_in == 4)
            acc = acc + xs[c] * w_ref[o, c]
        o_ref[0, o:o + 1, :] = acc.astype(o_ref.dtype)


def _round_up(v: int, m: int) -> int:
    return ((v + m - 1) // m) * m


def _pick_tile_p(hw: int, target: int = 32768) -> int:
    """Lane-dense spatial tile.

    Small inputs: one tile covering all of HW (rounded to 128 lanes).
    Large inputs: balance tiles around `target` pixels so padding waste is
    at most ~128 lanes per tile.
    """
    hw128 = _round_up(hw, 128)
    if hw128 <= target:
        return hw128
    num_tiles = -(-hw // target)          # cdiv
    tile = -(-hw // num_tiles)            # balanced tile size
    return _round_up(tile, 128)


@jax.jit
def torgb_forward(x_nchw, weight, bias):
    """Forward pass of ToRGB (1x1 conv, stride 1, no padding).

    Args:
      x_nchw: (N, C_in, H, W)        -- PyTorch NCHW convention.
      weight: (C_out, C_in, 1, 1)    -- PyTorch Conv2d weight.
      bias:   (C_out,)
    Returns:
      (N, C_out, H, W), same dtype as x_nchw.
    """
    n, c_in, h, w = x_nchw.shape
    c_out = weight.shape[0]
    hw = h * w

    tile_p = _pick_tile_p(hw)
    hw_pad = _round_up(hw, tile_p)

    # NCHW stays NCHW; flattening the spatial dims is contiguous (free).
    x3 = x_nchw.reshape(n, c_in, hw)
    if hw_pad != hw:
        x3 = jnp.pad(x3, ((0, 0), (0, 0), (0, hw_pad - hw)))

    w_mat = weight.reshape(c_out, c_in).astype(jnp.float32)  # SMEM scalars
    b_vec = bias.astype(jnp.float32)                         # SMEM scalars

    grid = (n, hw_pad // tile_p)

    itemsize = jnp.dtype(x_nchw.dtype).itemsize
    cost = pl.CostEstimate(
        flops=2 * n * hw_pad * c_in * c_out,
        transcendentals=0,
        bytes_accessed=n * hw_pad * (c_in + c_out) * itemsize
        + c_out * (c_in + 1) * 4,
    )

    y3 = pl.pallas_call(
        _torgb_kernel,
        out_shape=jax.ShapeDtypeStruct((n, c_out, hw_pad), x_nchw.dtype),
        grid_spec=pltpu.PrefetchScalarGridSpec(
            num_scalar_prefetch=0,
            grid=grid,
            in_specs=[
                # Tiny weight / bias: whole arrays in SMEM, no per-step DMA blocks.
                pl.BlockSpec(memory_space=pltpu.MemorySpace.SMEM),
                pl.BlockSpec(memory_space=pltpu.MemorySpace.SMEM),
                # Activations: channel dims full-extent, spatial tile on lanes.
                pl.BlockSpec((1, c_in, tile_p), lambda ni, pi: (ni, 0, pi)),
            ],
            out_specs=pl.BlockSpec((1, c_out, tile_p), lambda ni, pi: (ni, 0, pi)),
        ),
        compiler_params=pltpu.CompilerParams(
            dimension_semantics=("parallel", "parallel"),
            vmem_limit_bytes=32 * 1024 * 1024,  # few MiB actually used
        ),
        cost_estimate=cost,
    )(w_mat, b_vec, x3)

    if hw_pad != hw:
        y3 = y3[:, :, :hw]
    return y3.reshape(n, c_out, h, w)


if __name__ == "__main__":
    # Small shapes consistent with the module: ToRGB(in_channels=4, cdim=3, feature_size=16)
    N, C_IN, C_OUT, SZ = 2, 4, 3, 16

    key = jax.random.PRNGKey(0)
    kx, kw, kb = jax.random.split(key, 3)

    x = jax.random.normal(kx, (N, C_IN, SZ, SZ), dtype=jnp.float32)
    # TODO(synk): reference weight_init is external to the module; use a simple normal init.
    weight = 0.02 * jax.random.normal(kw, (C_OUT, C_IN, 1, 1), dtype=jnp.float32)
    bias = 0.01 * jax.random.normal(kb, (C_OUT,), dtype=jnp.float32)

    y = torgb_forward(x, weight, bias)
    y = jax.block_until_ready(y)

    # Reference check (pure JAX 1x1 conv as channel contraction).
    y_ref = (
        jnp.einsum("nchw,oc->nohw", x, weight.reshape(C_OUT, C_IN))
        + bias[None, :, None, None]
    )
    assert y.shape == (N, C_OUT, SZ, SZ)
    assert jnp.allclose(y, y_ref, atol=1e-5), "mismatch vs reference"

    print("KERNEL_OK")
</pallas_src>

<mosaic_0001>
module attributes {stable_mosaic.version = 11 : i64} {
  func.func @_torgb_kernel(%arg0: i32, %arg1: i32, %arg2: memref<3x4xf32, #tpu.memory_space<smem>>, %arg3: memref<3xf32, #tpu.memory_space<smem>>, %arg4: memref<1x4x256xf32, #tpu.memory_space<vmem>>, %arg5: memref<1x3x256xf32, #tpu.memory_space<vmem>>) attributes {dimension_semantics = [#tpu.dimension_semantics<parallel>, #tpu.dimension_semantics<parallel>], iteration_bounds = array<i64: 2, 1>, scalar_prefetch = 0 : i64, scratch_operands = 0 : i64, tpu.core_type = #tpu.core_type<tc>, window_params = [{transform_indices = @transform_0, window_bounds = array<i64: 3, 4>}, {transform_indices = @transform_1, window_bounds = array<i64: 3>}, {transform_indices = @transform_2, window_bounds = array<i64: 1, 4, 256>}, {transform_indices = @transform_3, window_bounds = array<i64: 1, 3, 256>}]} {
    %c0 = arith.constant 0 : index
    %c0_0 = arith.constant 0 : index
    %c0_1 = arith.constant 0 : index
    %0 = vector.load %arg4[%c0, %c0_0, %c0_1] : memref<1x4x256xf32, #tpu.memory_space<vmem>>, vector<1x1x256xf32>
    %1 = vector.shape_cast %0 : vector<1x1x256xf32> to vector<1x256xf32>
    %c0_2 = arith.constant 0 : index
    %c1 = arith.constant 1 : index
    %c0_3 = arith.constant 0 : index
    %2 = vector.load %arg4[%c0_2, %c1, %c0_3] : memref<1x4x256xf32, #tpu.memory_space<vmem>>, vector<1x1x256xf32>
    %3 = vector.shape_cast %2 : vector<1x1x256xf32> to vector<1x256xf32>
    %c0_4 = arith.constant 0 : index
    %c2 = arith.constant 2 : index
    %c0_5 = arith.constant 0 : index
    %4 = vector.load %arg4[%c0_4, %c2, %c0_5] : memref<1x4x256xf32, #tpu.memory_space<vmem>>, vector<1x1x256xf32>
    %5 = vector.shape_cast %4 : vector<1x1x256xf32> to vector<1x256xf32>
    %c0_6 = arith.constant 0 : index
    %c3 = arith.constant 3 : index
    %c0_7 = arith.constant 0 : index
    %6 = vector.load %arg4[%c0_6, %c3, %c0_7] : memref<1x4x256xf32, #tpu.memory_space<vmem>>, vector<1x1x256xf32>
    %7 = vector.shape_cast %6 : vector<1x1x256xf32> to vector<1x256xf32>
    %c0_8 = arith.constant 0 : index
    %c0_9 = arith.constant 0 : index
    %8 = memref.load %arg2[%c0_8, %c0_9] : memref<3x4xf32, #tpu.memory_space<smem>>
    %9 = vector.broadcast %8 : f32 to vector<1x256xf32>
    %10 = arith.mulf %1, %9 : vector<1x256xf32>
    %c0_10 = arith.constant 0 : index
    %11 = memref.load %arg3[%c0_10] : memref<3xf32, #tpu.memory_space<smem>>
    %12 = vector.broadcast %11 : f32 to vector<1x256xf32>
    %13 = arith.addf %10, %12 : vector<1x256xf32>
    %c0_11 = arith.constant 0 : index
    %c1_12 = arith.constant 1 : index
    %14 = memref.load %arg2[%c0_11, %c1_12] : memref<3x4xf32, #tpu.memory_space<smem>>
    %15 = vector.broadcast %14 : f32 to vector<1x256xf32>
    %16 = arith.mulf %3, %15 : vector<1x256xf32>
    %17 = arith.addf %13, %16 : vector<1x256xf32>
    %c0_13 = arith.constant 0 : index
    %c2_14 = arith.constant 2 : index
    %18 = memref.load %arg2[%c0_13, %c2_14] : memref<3x4xf32, #tpu.memory_space<smem>>
    %19 = vector.broadcast %18 : f32 to vector<1x256xf32>
    %20 = arith.mulf %5, %19 : vector<1x256xf32>
    %21 = arith.addf %17, %20 : vector<1x256xf32>
    %c0_15 = arith.constant 0 : index
    %c3_16 = arith.constant 3 : index
    %22 = memref.load %arg2[%c0_15, %c3_16] : memref<3x4xf32, #tpu.memory_space<smem>>
    %23 = vector.broadcast %22 : f32 to vector<1x256xf32>
    %24 = arith.mulf %7, %23 : vector<1x256xf32>
    %25 = arith.addf %21, %24 : vector<1x256xf32>
    %c0_17 = arith.constant 0 : index
    %c0_18 = arith.constant 0 : index
    %c0_19 = arith.constant 0 : index
    %26 = vector.load %arg5[%c0_17, %c0_18, %c0_19] : memref<1x3x256xf32, #tpu.memory_space<vmem>>, vector<1x1x256xf32>
    %27 = vector.shape_cast %26 : vector<1x1x256xf32> to vector<1x256xf32>
    %28 = vector.shape_cast %25 : vector<1x256xf32> to vector<1x1x256xf32>
    tpu.vector_store %arg5[%c0_17, %c0_18, %c0_19], %28 {strides = array<i32>} : memref<1x3x256xf32, #tpu.memory_space<vmem>>, vector<1x1x256xf32>,
    %c1_20 = arith.constant 1 : index
    %c0_21 = arith.constant 0 : index
    %29 = memref.load %arg2[%c1_20, %c0_21] : memref<3x4xf32, #tpu.memory_space<smem>>
    %30 = vector.broadcast %29 : f32 to vector<1x256xf32>
    %31 = arith.mulf %1, %30 : vector<1x256xf32>
    %c1_22 = arith.constant 1 : index
    %32 = memref.load %arg3[%c1_22] : memref<3xf32, #tpu.memory_space<smem>>
    %33 = vector.broadcast %32 : f32 to vector<1x256xf32>
    %34 = arith.addf %31, %33 : vector<1x256xf32>
    %c1_23 = arith.constant 1 : index
    %c1_24 = arith.constant 1 : index
    %35 = memref.load %arg2[%c1_23, %c1_24] : memref<3x4xf32, #tpu.memory_space<smem>>
    %36 = vector.broadcast %35 : f32 to vector<1x256xf32>
    %37 = arith.mulf %3, %36 : vector<1x256xf32>
    %38 = arith.addf %34, %37 : vector<1x256xf32>
    %c1_25 = arith.constant 1 : index
    %c2_26 = arith.constant 2 : index
    %39 = memref.load %arg2[%c1_25, %c2_26] : memref<3x4xf32, #tpu.memory_space<smem>>
    %40 = vector.broadcast %39 : f32 to vector<1x256xf32>
    %41 = arith.mulf %5, %40 : vector<1x256xf32>
    %42 = arith.addf %38, %41 : vector<1x256xf32>
    %c1_27 = arith.constant 1 : index
    %c3_28 = arith.constant 3 : index
    %43 = memref.load %arg2[%c1_27, %c3_28] : memref<3x4xf32, #tpu.memory_space<smem>>
    %44 = vector.broadcast %43 : f32 to vector<1x256xf32>
    %45 = arith.mulf %7, %44 : vector<1x256xf32>
    %46 = arith.addf %42, %45 : vector<1x256xf32>
    %c0_29 = arith.constant 0 : index
    %c1_30 = arith.constant 1 : index
    %c0_31 = arith.constant 0 : index
    %47 = vector.load %arg5[%c0_29, %c1_30, %c0_31] : memref<1x3x256xf32, #tpu.memory_space<vmem>>, vector<1x1x256xf32>
    %48 = vector.shape_cast %47 : vector<1x1x256xf32> to vector<1x256xf32>
    %49 = vector.shape_cast %46 : vector<1x256xf32> to vector<1x1x256xf32>
    tpu.vector_store %arg5[%c0_29, %c1_30, %c0_31], %49 {strides = array<i32>} : memref<1x3x256xf32, #tpu.memory_space<vmem>>, vector<1x1x256xf32>,
    %c2_32 = arith.constant 2 : index
    %c0_33 = arith.constant 0 : index
    %50 = memref.load %arg2[%c2_32, %c0_33] : memref<3x4xf32, #tpu.memory_space<smem>>
    %51 = vector.broadcast %50 : f32 to vector<1x256xf32>
    %52 = arith.mulf %1, %51 : vector<1x256xf32>
    %c2_34 = arith.constant 2 : index
    %53 = memref.load %arg3[%c2_34] : memref<3xf32, #tpu.memory_space<smem>>
    %54 = vector.broadcast %53 : f32 to vector<1x256xf32>
    %55 = arith.addf %52, %54 : vector<1x256xf32>
    %c2_35 = arith.constant 2 : index
    %c1_36 = arith.constant 1 : index
    %56 = memref.load %arg2[%c2_35, %c1_36] : memref<3x4xf32, #tpu.memory_space<smem>>
    %57 = vector.broadcast %56 : f32 to vector<1x256xf32>
    %58 = arith.mulf %3, %57 : vector<1x256xf32>
    %59 = arith.addf %55, %58 : vector<1x256xf32>
    %c2_37 = arith.constant 2 : index
    %c2_38 = arith.constant 2 : index
    %60 = memref.load %arg2[%c2_37, %c2_38] : memref<3x4xf32, #tpu.memory_space<smem>>
    %61 = vector.broadcast %60 : f32 to vector<1x256xf32>
    %62 = arith.mulf %5, %61 : vector<1x256xf32>
    %63 = arith.addf %59, %62 : vector<1x256xf32>
    %c2_39 = arith.constant 2 : index
    %c3_40 = arith.constant 3 : index
    %64 = memref.load %arg2[%c2_39, %c3_40] : memref<3x4xf32, #tpu.memory_space<smem>>
    %65 = vector.broadcast %64 : f32 to vector<1x256xf32>
    %66 = arith.mulf %7, %65 : vector<1x256xf32>
    %67 = arith.addf %63, %66 : vector<1x256xf32>
    %c0_41 = arith.constant 0 : index
    %c2_42 = arith.constant 2 : index
    %c0_43 = arith.constant 0 : index
    %68 = vector.load %arg5[%c0_41, %c2_42, %c0_43] : memref<1x3x256xf32, #tpu.memory_space<vmem>>, vector<1x1x256xf32>
    %69 = vector.shape_cast %68 : vector<1x1x256xf32> to vector<1x256xf32>
    %70 = vector.shape_cast %67 : vector<1x256xf32> to vector<1x1x256xf32>
    tpu.vector_store %arg5[%c0_41, %c2_42, %c0_43], %70 {strides = array<i32>} : memref<1x3x256xf32, #tpu.memory_space<vmem>>, vector<1x1x256xf32>,
    return
  }
  func.func @transform_0(%arg0: i32, %arg1: i32) -> (i32, i32) {
    %c0_i32 = arith.constant 0 : i32
    %c0_i32_0 = arith.constant 0 : i32
    %c0_i32_1 = arith.constant 0 : i32
    return %c0_i32, %c0_i32_0 : i32, i32
  }
  func.func @transform_1(%arg0: i32, %arg1: i32) -> i32 {
    %c0_i32 = arith.constant 0 : i32
    %c0_i32_0 = arith.constant 0 : i32
    return %c0_i32 : i32
  }
  func.func @transform_2(%arg0: i32, %arg1: i32) -> (i32, i32, i32) {
    %c0_i32 = arith.constant 0 : i32
    %c0_i32_0 = arith.constant 0 : i32
    return %arg0, %c0_i32, %arg1 : i32, i32, i32
  }
  func.func @transform_3(%arg0: i32, %arg1: i32) -> (i32, i32, i32) {
    %c0_i32 = arith.constant 0 : i32
    %c0_i32_0 = arith.constant 0 : i32
    return %arg0, %c0_i32, %arg1 : i32, i32, i32
  }
}

</mosaic_0001>

<llo_original>
// kernel: torgb_forward.1
$region0: #{torgb_forward.1}
  #allocation0 [shape = 'u32[]', space=smem, size = 0x4, offset = 0x4, fixed_abs, tag = 'smem constant byte address 0x4 - core index']
  #allocation1 [shape = 'u32[72,128]{1,0:T(1,128)}', space=vmem, size = 0x9000, scoped, tag = 'internal scratch']
  %s0 = inlined_call_operand.vmem [shape: f32[3,4], index: 0, kind: input, shape index: {}]
  %s1 = inlined_call_operand.vmem [shape: f32[3], index: 1, kind: input, shape index: {}]
  %s2 = inlined_call_operand.vmem [shape: f32[2,4,256], index: 2, kind: input, shape index: {}]
  %s3 = inlined_call_operand.vmem [shape: f32[2,3,256], index: 3, kind: output, shape index: {}]
  %s4 = sld [smem:[#allocation0]]
  $region53: #{torgb_forward.1} parent=0
    _
  %s6 = ssub.s32 1, %s4
  %s7 = scalar_select 0, %s6, %s4
  $region1: #{torgb_forward.1} parent=0
    #allocation2 [shape = 'u8[2048]{0}', space=smem, size = 0x800, scoped, tag = 'input window, operand 0, single buffered']
    #allocation3 [shape = 's32[2]{0}', space=sflag, size = 0x8, scoped, tag = 'scoped memory for torgb_forward.1']
    #allocation4 [shape = 'u8[512]{0}', space=smem, size = 0x200, scoped, tag = 'input window, operand 1, single buffered']
    #allocation5 [shape = 's32[1]{0}', space=sflag, size = 0x4, scoped, tag = 'scoped memory for torgb_forward.1']
    %8 = vsyncpa [#allocation3], 0
    %9 = vsyncpa [#allocation5], 0
    loop: start=0, step=1, limit=4
    $region2: #{torgb_forward.1} parent=1 // loop_pre_header
      _
    $region3: #{torgb_forward.1} parent=1 // loop_header
      %s11 = sphi 0, %s15
      %p12 = scmp.ge.s32.totalorder %s11, 4
      %s18 = sphi 0, %s30
      %s19 = sphi 0, %s26
      %s20 = sphi 0, %s18
      %s21 = sphi 0, %s19
      %s22 = sphi 0, %s20
      %s23 = sphi 0, %s21
      %s31 = sphi 0, %s31
      %s33 = sphi 0, %s31
      %s34 = sphi 0, %s33
      %s48 = sphi 0, %s34
      %s52 = sphi 0, %s52
      %s54 = sphi 0, %s52
      %s55 = sphi 0, %s54
      %s69 = sphi 0, %s55
      %s77 = sphi 0, %s79
      %s80 = sphi 0, %s77
      %s81 = sphi 0, %s80
      %s97 = sphi 0, %s81
      %s105 = sphi 0, %s107
      %s108 = sphi 0, %s105
      %s109 = sphi 0, %s108
      %s125 = sphi 0, %s109
    $region4: #{torgb_forward.1} parent=1 // loop_header_branch
      %14 = sbr.rel (%p12) target = $region8
    $region5: #{torgb_forward.1} parent=1 // loop_body
      %s16 = ssub.s32 %s11, 1
      %s17 = ssub.s32 %s11, 2
      %s24 = sadd.s32 1, %s19
      %p25 = scmp.ge.s32.totalorder %s24, 1
      %s26 = scalar_select %p25, 0, %s24
      %s27 = sadd.s32 1, %s18
      %s28 = scalar_select %p25, %s27, %s18
      %p29 = scmp.ge.s32.totalorder %s28, 2
      %s30 = scalar_select %p29, 0, %s28
      %s32 = sadd.s32 %s31, 1
      %p35 = scmp.eq.s32.totalorder %s11, 1
      %p36 = scmp.ne.s32.totalorder %s31, %s33
      %p37 = scmp.eq.s32.totalorder %s11, 0
      %p38 = por %p36, %p37
      %p39 = scmp.ne.s32.totalorder %s31, %s33
      %p40 = scmp.eq.s32.totalorder %s16, 1
      %p41 = por %p39, %p40
      %p42 = scmp.ne.s32.totalorder %s33, %s34
      %p43 = scmp.eq.s32.totalorder %s16, 0
      %p44 = por %p42, %p43
      %p45 = scmp.ne.s32.totalorder %s33, %s34
      %p46 = scmp.eq.s32.totalorder %s17, 1
      %p47 = por %p45, %p46
      %p49 = scmp.ne.s32.totalorder %s34, %s48
      %p50 = scmp.eq.s32.totalorder %s17, 0
      %p51 = por %p49, %p50
      %s53 = sadd.s32 %s52, 1
      %p56 = scmp.eq.s32.totalorder %s11, 1
      %p57 = scmp.ne.s32.totalorder %s52, %s54
      %p58 = scmp.eq.s32.totalorder %s11, 0
      %p59 = por %p57, %p58
      %p60 = scmp.ne.s32.totalorder %s52, %s54
      %p61 = scmp.eq.s32.totalorder %s16, 1
      %p62 = por %p60, %p61
      %p63 = scmp.ne.s32.totalorder %s54, %s55
      %p64 = scmp.eq.s32.totalorder %s16, 0
      %p65 = por %p63, %p64
      %p66 = scmp.ne.s32.totalorder %s54, %s55
      %p67 = scmp.eq.s32.totalorder %s17, 1
      %p68 = por %p66, %p67
      %p70 = scmp.ne.s32.totalorder %s55, %s69
      %p71 = scmp.eq.s32.totalorder %s17, 0
      %p72 = por %p70, %p71
      %s73 = ssub.s32 %s18, %s30
      %s74 = ssub.s32 %s19, %s26
      %s75 = sor.u32 %s73, %s74
      %p76 = scmp.eq.s32.totalorder %s75, 0
      %s78 = sadd.s32 %s77, 1
      %s79 = scalar_select %p76, %s77, %s78
      %p82 = pneg %p76
      %p83 = scmp.eq.s32.totalorder %s11, 1
      %p84 = por %p82, %p83
      %p85 = scmp.ne.s32.totalorder %s77, %s80
      %p86 = scmp.eq.s32.totalorder %s11, 0
      %p87 = por %p85, %p86
      %p88 = scmp.ne.s32.totalorder %s77, %s80
      %p89 = scmp.eq.s32.totalorder %s16, 1
      %p90 = por %p88, %p89
      %p91 = scmp.ne.s32.totalorder %s80, %s81
      %p92 = scmp.eq.s32.totalorder %s16, 0
      %p93 = por %p91, %p92
      %p94 = scmp.ne.s32.totalorder %s80, %s81
      %p95 = scmp.eq.s32.totalorder %s17, 1
      %p96 = por %p94, %p95
      %p98 = scmp.ne.s32.totalorder %s81, %s97
      %p99 = scmp.eq.s32.totalorder %s17, 0
      %p100 = por %p98, %p99
      %s101 = ssub.s32 %s18, %s30
      %s102 = ssub.s32 %s19, %s26
      %s103 = sor.u32 %s101, %s102
      %p104 = scmp.eq.s32.totalorder %s103, 0
      %s106 = sadd.s32 %s105, 1
      %s107 = scalar_select %p104, %s105, %s106
      %p110 = pneg %p104
      %p111 = scmp.eq.s32.totalorder %s11, 1
      %p112 = por %p110, %p111
      %p113 = scmp.ne.s32.totalorder %s105, %s108
      %p114 = scmp.eq.s32.totalorder %s11, 0
      %p115 = por %p113, %p114
      %p116 = scmp.ne.s32.totalorder %s105, %s108
      %p117 = scmp.eq.s32.totalorder %s16, 1
      %p118 = por %p116, %p117
      %p119 = scmp.ne.s32.totalorder %s108, %s109
      %p120 = scmp.eq.s32.totalorder %s16, 0
      %p121 = por %p119, %p120
      %p122 = scmp.ne.s32.totalorder %s108, %s109
      %p123 = scmp.eq.s32.totalorder %s17, 1
      %p124 = por %p122, %p123
      %p126 = scmp.ne.s32.totalorder %s109, %s125
      %p127 = scmp.eq.s32.totalorder %s17, 0
      %p128 = por %p126, %p127
      %p129 = scmp.le.s32.totalorder 1, %s11
      %p130 = scmp.lt.s32.totalorder %s11, 3
      %p131 = pnand %p129, %p130
      %p132 = pneg %p131
      // Predicated region
      $region9: #{torgb_forward.1} parent=5 // pred_check
        _
      $region10: #{torgb_forward.1} parent=5 // pred_check_branch
        %134 = sbr.rel (%p131) target = $region12
      $region11: #{torgb_forward.1} parent=5 // pred_region
        %s135 = ssub.s32 %s11, 1
        // Predicated region
        $region13: #{torgb_forward.1} parent=11 // pred_check
          %p136 = pneg %p44
        $region14: #{torgb_forward.1} parent=11 // pred_check_branch
          %138 = sbr.rel (%p136) target = $region16
        $region15: #{torgb_forward.1} parent=11 // pred_region
          %140 = vsyncadd [#allocation3], 0
          %s142 = sshll.u32 %s0, 4
          %s143 = int_to_ptr.vmem [resolvable:$true] %s142
          %145 = dma.vmem_to_smem %s143, 64, [#allocation2], [#allocation3]
        $region16: #{torgb_forward.1} parent=11 // pred_fallthru
          _
        // Predicated region
        $region17: #{torgb_forward.1} parent=11 // pred_check
          %p146 = pneg %p65
        $region18: #{torgb_forward.1} parent=11 // pred_check_branch
          %148 = sbr.rel (%p146) target = $region20
        $region19: #{torgb_forward.1} parent=11 // pred_region
          %150 = vsyncadd [#allocation5], 0
          %s152 = sshll.u32 %s1, 4
          %s153 = int_to_ptr.vmem [resolvable:$true] %s152
          %155 = dma.vmem_to_smem %s153, 16, [#allocation4], [#allocation5]
        $region20: #{torgb_forward.1} parent=11 // pred_fallthru
          _
      $region12: #{torgb_forward.1} parent=5 // pred_fallthru
        _
      %p156 = scmp.lt.s32.totalorder %s11, 2
      // Predicated region
      $region21: #{torgb_forward.1} parent=5 // pred_check
        %p157 = pneg %p156
      $region22: #{torgb_forward.1} parent=5 // pred_check_branch
        %159 = sbr.rel (%p157) target = $region24
      $region23: #{torgb_forward.1} parent=5 // pred_region
        // Predicated region
        $region25: #{torgb_forward.1} parent=23 // pred_check
          %p160 = pneg %p87
        $region26: #{torgb_forward.1} parent=23 // pred_check_branch
          %162 = sbr.rel (%p160) target = $region28
        $region27: #{torgb_forward.1} parent=23 // pred_region
          %s163 = smul.u32 2, %s19
          %p164 = scmp.lt.s32.totalorder %s18, 1
          %s165 = scalar_select %p164, %s18, 1
          %p166 = scmp.lt.s32.totalorder %s163, 1
          %s167 = scalar_select %p166, %s163, 1
          %s168 = smul.addr %s165, 2
          %s169 = sadd.s32 %s167, %s168
          %s170 = smul.addr %s169, 4
          %s171 = scalar_lea.vmem %s2, %s170
          %s172 = smul.u32 2, %s19
        $region28: #{torgb_forward.1} parent=23 // pred_fallthru
          _
      $region24: #{torgb_forward.1} parent=5 // pred_fallthru
        _
      %p173 = scmp.le.s32.totalorder 1, %s11
      %p174 = scmp.lt.s32.totalorder %s11, 3
      %p175 = pnand %p173, %p174
      %p176 = pneg %p175
      // Predicated region
      $region29: #{torgb_forward.1} parent=5 // pred_check
        _
      $region30: #{torgb_forward.1} parent=5 // pred_check_branch
        %178 = sbr.rel (%p175) target = $region32
      $region31: #{torgb_forward.1} parent=5 // pred_region
        %s179 = ssub.s32 %s11, 1
        // Predicated region
        $region33: #{torgb_forward.1} parent=31 // pred_check
          %p180 = pneg %p44
        $region34: #{torgb_forward.1} parent=31 // pred_check_branch
          %182 = sbr.rel (%p180) target = $region36
        $region35: #{torgb_forward.1} parent=31 // pred_region
          %184 = dma.done [#allocation3], 64
        $region36: #{torgb_forward.1} parent=31 // pred_fallthru
          _
        // Predicated region
        $region37: #{torgb_forward.1} parent=31 // pred_check
          %p185 = pneg %p65
        $region38: #{torgb_forward.1} parent=31 // pred_check_branch
          %187 = sbr.rel (%p185) target = $region40
        $region39: #{torgb_forward.1} parent=31 // pred_region
          %189 = dma.done [#allocation5], 16
        $region40: #{torgb_forward.1} parent=31 // pred_fallthru
          _
        %190 = sfence
        %p191 = pneg %p44
        %p192 = pneg %p41
        %p193 = pneg %p65
        %p194 = pneg %p62
        %s195 = smul.u32 2, %s21
        %p196 = scmp.lt.s32.totalorder %s20, 1
        %s197 = scalar_select %p196, %s20, 1
        %p198 = scmp.lt.s32.totalorder %s195, 1
        %s199 = scalar_select %p198, %s195, 1
        %s200 = smul.addr %s197, 2
        %s201 = sadd.s32 %s199, %s200
        %s202 = smul.addr %s201, 4
        %s203 = scalar_lea.vmem %s2, %s202
        %p204 = pneg %p93
        %p205 = pneg %p90
        %p206 = pneg %p121
        %p207 = pneg %p118
        %s208 = smul.u32 2, %s21
        %p209 = scmp.lt.s32.totalorder %s20, 1
        %s210 = scalar_select %p209, %s20, 1
        %p211 = scmp.lt.s32.totalorder %s208, 1
        %s212 = scalar_select %p211, %s208, 1
        %s213 = smul.addr %s210, 2
        %s214 = sadd.s32 %s212, %s213
        %s215 = smul.addr %s214, 4
        %s216 = scalar_lea.vmem %s3, %s215
        %s217 = smul.u32 2, %s21
        %p218 = scmp.lt.s32.totalorder %s20, 1
        %s219 = scalar_select %p218, %s20, 1
        %p220 = scmp.lt.s32.totalorder %s217, 1
        %s221 = scalar_select %p220, %s217, 1
        %s222 = smul.addr %s219, 2
        %s223 = sadd.s32 %s221, %s222
        %s224 = smul.addr %s223, 4
        %s225 = scalar_lea.vmem %s2, %s224
        %s226 = smul.u32 2, %s21
        %s227 = smul.u32 2, %s21
        %p228 = scmp.lt.s32.totalorder %s20, 1
        %s229 = scalar_select %p228, %s20, 1
        %p230 = scmp.lt.s32.totalorder %s227, 1
        %s231 = scalar_select %p230, %s227, 1
        %s232 = smul.addr %s229, 2
        %s233 = sadd.s32 %s231, %s232
        %s234 = smul.addr %s233, 4
        %s235 = scalar_lea.vmem %s3, %s234
        %s236 = smul.u32 2, %s21
        %v237 = vld [vmem:[%s225] ss:$4 sm:$0x3]
        %s238 = scalar_lea.vmem %s225, 1
        %v239 = vld [vmem:[%s238] ss:$4 sm:$0x3]
        %s240 = scalar_lea.vmem %s225, 2
        %v241 = vld [vmem:[%s240] ss:$4 sm:$0x3]
        %s242 = scalar_lea.vmem %s225, 3
        %v243 = vld [vmem:[%s242] ss:$4 sm:$0x3]
        %s244 = sld [smem:[#allocation2]]
        %v245 = vstv %s244
        %v246 = vmul.f32 %v237, %v245
        %s247 = sld [smem:[#allocation4]]
        %v248 = vstv %s247
        %v249 = vadd.f32 %v246, %v248
        %s250 = sld [smem:[#allocation2 + $0x1]]
        %v251 = vstv %s250
        %v252 = vmul.f32 %v239, %v251
        %v253 = vadd.f32 %v249, %v252
        %s254 = sld [smem:[#allocation2 + $0x2]]
        %v255 = vstv %s254
        %v256 = vmul.f32 %v241, %v255
        %v257 = vadd.f32 %v253, %v256
        %s258 = sld [smem:[#allocation2 + $0x3]]
        %v259 = vstv %s258
        %v260 = vmul.f32 %v243, %v259
        %v261 = vadd.f32 %v257, %v260
        %v262 = vlaneseq
        %vm263 = vcmp.ge.s32.totalorder %v262, 0
        %vm264 = vcmp.lt.s32.totalorder %v262, 256
        %vm265 = vmand %vm263, %vm264
        %266 = vst.msk [vmem:[%s235] ss:$4 sm:$0x3] %vm265, %v261
        %s267 = sld [smem:[#allocation2 + $0x80]]
        %v268 = vstv %s267
        %v269 = vmul.f32 %v237, %v268
        %s270 = sld [smem:[#allocation4 + $0x1]]
        %v271 = vstv %s270
        %v272 = vadd.f32 %v269, %v271
        %s273 = sld [smem:[#allocation2 + $0x81]]
        %v274 = vstv %s273
        %v275 = vmul.f32 %v239, %v274
        %v276 = vadd.f32 %v272, %v275
        %s277 = sld [smem:[#allocation2 + $0x82]]
        %v278 = vstv %s277
        %v279 = vmul.f32 %v241, %v278
        %v280 = vadd.f32 %v276, %v279
        %s281 = sld [smem:[#allocation2 + $0x83]]
        %v282 = vstv %s281
        %v283 = vmul.f32 %v243, %v282
        %v284 = vadd.f32 %v280, %v283
        %s285 = scalar_lea.vmem %s235, 1
        %286 = vst.msk [vmem:[%s285] ss:$4 sm:$0x3] %vm265, %v284
        %s287 = sld [smem:[#allocation2 + $0x100]]
        %v288 = vstv %s287
        %v289 = vmul.f32 %v237, %v288
        %s290 = sld [smem:[#allocation4 + $0x2]]
        %v291 = vstv %s290
        %v292 = vadd.f32 %v289, %v291
        %s293 = sld [smem:[#allocation2 + $0x101]]
        %v294 = vstv %s293
        %v295 = vmul.f32 %v239, %v294
        %v296 = vadd.f32 %v292, %v295
        %s297 = sld [smem:[#allocation2 + $0x102]]
        %v298 = vstv %s297
        %v299 = vmul.f32 %v241, %v298
        %v300 = vadd.f32 %v296, %v299
        %s301 = sld [smem:[#allocation2 + $0x103]]
        %v302 = vstv %s301
        %v303 = vmul.f32 %v243, %v302
        %v304 = vadd.f32 %v300, %v303
        %s305 = scalar_lea.vmem %s235, 2
        %306 = vst.msk [vmem:[%s305] ss:$4 sm:$0x3] %vm265, %v304
        %s307 = smul.u32 2, %s21
        %p308 = scmp.lt.s32.totalorder %s20, 1
        %s309 = scalar_select %p308, %s20, 1
        %p310 = scmp.lt.s32.totalorder %s307, 1
        %s311 = scalar_select %p310, %s307, 1
        %s312 = smul.addr %s309, 2
        %s313 = sadd.s32 %s311, %s312
        %s314 = smul.addr %s313, 4
        %s315 = scalar_lea.vmem %s3, %s314
        // Predicated region
        $region41: #{torgb_forward.1} parent=31 // pred_check
          %p316 = pneg %p118
        $region42: #{torgb_forward.1} parent=31 // pred_check_branch
          %318 = sbr.rel (%p316) target = $region44
        $region43: #{torgb_forward.1} parent=31 // pred_region
          %s319 = smul.u32 2, %s21
        $region44: #{torgb_forward.1} parent=31 // pred_fallthru
          _
      $region32: #{torgb_forward.1} parent=5 // pred_fallthru
        _
      %p320 = scmp.le.s32.totalorder 2, %s11
      // Predicated region
      $region45: #{torgb_forward.1} parent=5 // pred_check
        %p321 = pneg %p320
      $region46: #{torgb_forward.1} parent=5 // pred_check_branch
        %323 = sbr.rel (%p321) target = $region48
      $region47: #{torgb_forward.1} parent=5 // pred_region
        %s324 = ssub.s32 %s11, 2
        // Predicated region
        $region49: #{torgb_forward.1} parent=47 // pred_check
          %p325 = pneg %p124
        $region50: #{torgb_forward.1} parent=47 // pred_check_branch
          %327 = sbr.rel (%p325) target = $region52
        $region51: #{torgb_forward.1} parent=47 // pred_region
          %s328 = smul.u32 2, %s23
          %p329 = scmp.lt.s32.totalorder %s22, 1
          %s330 = scalar_select %p329, %s22, 1
          %p331 = scmp.lt.s32.totalorder %s328, 1
          %s332 = scalar_select %p331, %s328, 1
          %s333 = smul.addr %s330, 2
          %s334 = sadd.s32 %s332, %s333
          %s335 = smul.addr %s334, 4
          %s336 = scalar_lea.vmem %s3, %s335
        $region52: #{torgb_forward.1} parent=47 // pred_fallthru
          _
      $region48: #{torgb_forward.1} parent=5 // pred_fallthru
        _
    $region6: #{torgb_forward.1} parent=1 // loop_footer
      %s15 = sadd.s32 1, %s11
    $region7: #{torgb_forward.1} parent=1 // loop_footer_branch
      %10 = sbr.rel target = $region3
    $region8: #{torgb_forward.1} parent=1 // loop_exit
      _
    %337 = vsyncpa [#allocation3], 1
    %s338 = scalar_lea.sflag [#allocation3], 1
    %339 = vsyncpa %s338, 1
    %340 = vsyncpa [#allocation5], 1

</llo_original>
